<compile_context>
chip_gen: v7x
topology: tpu7x:2x2x1
jax: 0.10.0
libtpu: 0.0.40
codegen_flags: <defaults>
</compile_context>

<pallas_src>
import functools

import jax
import jax.numpy as jnp
from jax.experimental import pallas as pl
from jax.experimental.pallas import tpu as pltpu

_COS_EPS = 1e-8      # torch.nn.CosineSimilarity default eps (denominator clamp)
_NORM_EPS = 1e-4     # sqrt(_COS_EPS): per-norm clamp (identical except near-zero vectors)
_LANE = 128
_NEG_BIG = -1e30     # "minus infinity" for masked (padded) key columns


def _round_up(x, m):
    return ((x + m - 1) // m) * m


def _infonce_kernel(z_ref, invq_ref, zp_ref, zn_ref, invp_ref, invn_ref,
                    loss_ref, m_sc, l_sc, t_sc, *,
                    hard_neg_weight, batch, mask_keys):
    i = pl.program_id(0)            # query-row tile
    k = pl.program_id(1)            # key tile (reduction axis, innermost)
    tq = z_ref.shape[0]
    tk = zp_ref.shape[0]

    @pl.when(k == 0)
    def _():
        m_sc[...] = jnp.full_like(m_sc, _NEG_BIG)   # running max
        l_sc[...] = jnp.zeros_like(l_sc)            # running sum(exp)
        t_sc[...] = jnp.zeros_like(t_sc)            # target logit (diag of p_sim)

    # Pairwise dots on the MXU, contracting the lane (feature) dim of both
    # operands -> transpose-free; operands stay in their native dtype.
    dn = (((1,), (1,)), ((), ()))
    p_dot = jax.lax.dot_general(z_ref[...], zp_ref[...], dn,
                                preferred_element_type=jnp.float32)   # (tq, tk)
    n_dot = jax.lax.dot_general(z_ref[...], zn_ref[...], dn,
                                preferred_element_type=jnp.float32)   # (tq, tk)

    # Cosine sims / taf: inverse norms precomputed in the wrapper
    # (inv_q already folds 1/taf) -> just two broadcast multiplies here.
    invq = invq_ref[...]                            # (tq, 1) f32
    p_sim = p_dot * invq * invp_ref[...]            # (tq, tk)
    n_sim = n_dot * invq * invn_ref[...]            # (tq, tk)

    # Diagonal (label) mask in global coordinates for this (tq, tk) tile.
    grow = i * tq + jax.lax.broadcasted_iota(jnp.int32, (tq, tk), 0)
    gcol = k * tk + jax.lax.broadcasted_iota(jnp.int32, (tq, tk), 1)
    diag = grow == gcol

    if hard_neg_weight != 0.0:      # statically skipped in the common w == 0 case
        n_sim = n_sim + jnp.where(diag, jnp.float32(hard_neg_weight), 0.0)

    if mask_keys:                   # static: only when the key axis was padded
        invalid = gcol >= batch
        p_sim = jnp.where(invalid, jnp.float32(_NEG_BIG), p_sim)
        n_sim = jnp.where(invalid, jnp.float32(_NEG_BIG), n_sim)

    # Online softmax over the concatenated [p | n] key axis.
    tile_max = jnp.maximum(jnp.max(p_sim, axis=-1, keepdims=True),
                           jnp.max(n_sim, axis=-1, keepdims=True))
    m_new = jnp.maximum(m_sc[...], tile_max)
    alpha = jnp.exp(m_sc[...] - m_new)
    l_sc[...] = (alpha * l_sc[...]
                 + jnp.sum(jnp.exp(p_sim - m_new), axis=-1, keepdims=True)
                 + jnp.sum(jnp.exp(n_sim - m_new), axis=-1, keepdims=True))
    t_sc[...] = t_sc[...] + jnp.sum(jnp.where(diag, p_sim, 0.0),
                                    axis=-1, keepdims=True)
    m_sc[...] = m_new

    @pl.when(k == pl.num_programs(1) - 1)
    def _():
        # Per-row cross entropy: logsumexp(logits) - target_logit.
        loss_ref[...] = m_sc[...] + jnp.log(l_sc[...]) - t_sc[...]


def supervised_infonce_loss(z, z_p, z_n, *, taf=0.05, hard_negative_weight=0.0,
                            row_tile=256, key_tile=512):
    """z, z_p, z_n: (B, D).  Returns scalar f32 loss (mean cross entropy)."""
    B, D = z.shape
    assert row_tile % _LANE == 0 and key_tile % _LANE == 0

    # --- hoisted per-vector inverse norms (f32), computed once in the wrapper.
    def _inv_norm(x):
        n = jnp.sqrt(jnp.sum(jnp.square(x.astype(jnp.float32)), axis=-1))
        return 1.0 / jnp.maximum(n, _NORM_EPS)

    inv_q = (_inv_norm(z) * (1.0 / float(taf)))[:, None]    # (B, 1), 1/taf folded in
    inv_p = _inv_norm(z_p)[None, :]                         # (1, B)
    inv_n = _inv_norm(z_n)[None, :]                         # (1, B)

    # --- feature pad to a lane multiple (zero pad is exact for the dots;
    #     norms above were computed from the unpadded data).
    Dp = max(_LANE, _round_up(D, _LANE))
    if Dp != D:
        fpad = ((0, 0), (0, Dp - D))
        z, z_p, z_n = jnp.pad(z, fpad), jnp.pad(z_p, fpad), jnp.pad(z_n, fpad)

    # --- query-row tiling (parallel axis); padded rows excluded from the mean.
    tq = row_tile if B > row_tile else B
    grid_q = pl.cdiv(B, tq)
    Bq = grid_q * tq
    if Bq != B:
        z = jnp.pad(z, ((0, Bq - B), (0, 0)))
        inv_q = jnp.pad(inv_q, ((0, Bq - B), (0, 0)))

    # --- key tiling (innermost "arbitrary" axis, online softmax); padded key
    #     columns are masked to -1e30 inside the kernel.
    tk = key_tile if B > key_tile else B
    grid_k = pl.cdiv(B, tk)
    Bk = grid_k * tk
    mask_keys = Bk != B
    if mask_keys:
        kpad = ((0, Bk - B), (0, 0))
        z_p, z_n = jnp.pad(z_p, kpad), jnp.pad(z_n, kpad)
        inv_p = jnp.pad(inv_p, ((0, 0), (0, Bk - B)))
        inv_n = jnp.pad(inv_n, ((0, 0), (0, Bk - B)))

    kernel = functools.partial(
        _infonce_kernel,
        hard_neg_weight=float(hard_negative_weight),
        batch=B,
        mask_keys=mask_keys,
    )

    # Explicit scoped-VMEM budget: double-buffered tiles + f32 logits temps,
    # with ~30% headroom (floor 32 MiB, cap 64 MiB for v7x per-TC VMEM).
    isz = z.dtype.itemsize
    est = (2 * tq * Dp * isz              # query tile (double-buffered)
           + 2 * 2 * tk * Dp * isz        # z_p / z_n key tiles (double-buffered)
           + 2 * tq * _LANE * 4           # inv_q blocks (lane-padded)
           + 2 * 2 * 8 * tk * 4           # inv_p / inv_n blocks (sublane-padded)
           + 2 * tq * _LANE * 4           # output blocks
           + 3 * tq * _LANE * 4           # m/l/t scratch
           + 8 * tq * tk * 4)             # p/n f32 logits + exp/select temporaries
    vmem_limit = int(min(64 * 1024 * 1024, max(32 * 1024 * 1024, 1.3 * est)))

    per_row = pl.pallas_call(
        kernel,
        out_shape=jax.ShapeDtypeStruct((Bq, 1), jnp.float32),
        grid=(grid_q, grid_k),
        in_specs=[
            pl.BlockSpec((tq, Dp), lambda i, k: (i, 0)),   # queries: row-tiled
            pl.BlockSpec((tq, 1), lambda i, k: (i, 0)),    # 1/(taf*||z||)
            pl.BlockSpec((tk, Dp), lambda i, k: (k, 0)),   # positives: key-tiled
            pl.BlockSpec((tk, Dp), lambda i, k: (k, 0)),   # negatives: key-tiled
            pl.BlockSpec((1, tk), lambda i, k: (0, k)),    # 1/||z_p||
            pl.BlockSpec((1, tk), lambda i, k: (0, k)),    # 1/||z_n||
        ],
        out_specs=pl.BlockSpec((tq, 1), lambda i, k: (i, 0)),
        scratch_shapes=[pltpu.VMEM((tq, 1), jnp.float32)] * 3,
        compiler_params=pltpu.CompilerParams(
            dimension_semantics=("parallel", "arbitrary"),
            vmem_limit_bytes=vmem_limit),
    )(z, inv_q, z_p, z_n, inv_p, inv_n)

    # Padded query rows (if any) are excluded from the mean.
    return jnp.sum(per_row[:B, 0]) / jnp.float32(B)


def _reference(z, z_p, z_n, taf, w):
    """Pure-JAX reference mirroring the PyTorch forward."""
    def cos(a, b):
        num = a @ b.T
        den = jnp.maximum(
            jnp.linalg.norm(a, axis=-1, keepdims=True)
            * jnp.linalg.norm(b, axis=-1, keepdims=True).T,
            _COS_EPS,
        )
        return num / den

    B = z.shape[0]
    p_sim = cos(z, z_p) / taf
    n_sim = cos(z, z_n) / taf
    logits = jnp.concatenate([p_sim, n_sim], axis=1)
    logits = logits + jnp.concatenate(
        [jnp.zeros((B, B)), w * jnp.eye(B)], axis=1
    )
    labels = jnp.arange(B)
    log_probs = jax.nn.log_softmax(logits, axis=-1)
    return -jnp.mean(log_probs[jnp.arange(B), labels])


if __name__ == "__main__":
    TAF = 0.05
    HARD_NEG_WEIGHT = 0.5
    key = jax.random.PRNGKey(0)

    # 1) Small single-tile case (matches module-sized example).
    B, D = 8, 32
    k1, k2, k3 = jax.random.split(key, 3)
    z = jax.random.normal(k1, (B, D), dtype=jnp.float32)
    z_p = jax.random.normal(k2, (B, D), dtype=jnp.float32)
    z_n = jax.random.normal(k3, (B, D), dtype=jnp.float32)
    loss = jax.block_until_ready(
        supervised_infonce_loss(z, z_p, z_n, taf=TAF,
                                hard_negative_weight=HARD_NEG_WEIGHT))
    ref = _reference(z, z_p, z_n, TAF, HARD_NEG_WEIGHT)
    assert jnp.allclose(loss, ref, rtol=1e-5, atol=1e-5), (loss, ref)

    # 2) Multi-tile case exercising the online-softmax key axis, key masking
    #    and query-row padding (small tile sizes forced for coverage).
    B2, D2 = 200, 96
    k4, k5, k6 = jax.random.split(jax.random.PRNGKey(0), 3)
    z2 = jax.random.normal(k4, (B2, D2), dtype=jnp.float32)
    z2_p = jax.random.normal(k5, (B2, D2), dtype=jnp.float32)
    z2_n = jax.random.normal(k6, (B2, D2), dtype=jnp.float32)
    loss2 = jax.block_until_ready(
        supervised_infonce_loss(z2, z2_p, z2_n, taf=TAF,
                                hard_negative_weight=HARD_NEG_WEIGHT,
                                row_tile=128, key_tile=128))
    ref2 = _reference(z2, z2_p, z2_n, TAF, HARD_NEG_WEIGHT)
    assert jnp.allclose(loss2, ref2, rtol=1e-4, atol=1e-4), (loss2, ref2)

    print("KERNEL_OK")
</pallas_src>

<mosaic_0001>
module attributes {stable_mosaic.version = 11 : i64} {
  func.func @_infonce_kernel(%arg0: i32, %arg1: i32, %arg2: memref<8x128xf32, #tpu.memory_space<vmem>>, %arg3: memref<8x1xf32, #tpu.memory_space<vmem>>, %arg4: memref<8x128xf32, #tpu.memory_space<vmem>>, %arg5: memref<8x128xf32, #tpu.memory_space<vmem>>, %arg6: memref<1x8xf32, #tpu.memory_space<vmem>>, %arg7: memref<1x8xf32, #tpu.memory_space<vmem>>, %arg8: memref<8x1xf32, #tpu.memory_space<vmem>>, %arg9: memref<8x1xf32, #tpu.memory_space<vmem>>, %arg10: memref<8x1xf32, #tpu.memory_space<vmem>>, %arg11: memref<8x1xf32, #tpu.memory_space<vmem>>) attributes {dimension_semantics = [#tpu.dimension_semantics<parallel>, #tpu.dimension_semantics<arbitrary>], iteration_bounds = array<i64: 1, 1>, scalar_prefetch = 0 : i64, scratch_operands = 3 : i64, tpu.core_type = #tpu.core_type<tc>, window_params = [{transform_indices = @transform_0, window_bounds = array<i64: 8, 128>}, {transform_indices = @transform_1, window_bounds = array<i64: 8, 1>}, {transform_indices = @transform_2, window_bounds = array<i64: 8, 128>}, {transform_indices = @transform_3, window_bounds = array<i64: 8, 128>}, {transform_indices = @transform_4, window_bounds = array<i64: 1, 8>}, {transform_indices = @transform_5, window_bounds = array<i64: 1, 8>}, {transform_indices = @transform_6, window_bounds = array<i64: 8, 1>}]} {
    %c0_i32 = arith.constant 0 : i32
    %0 = arith.cmpi eq, %arg1, %c0_i32 : i32
    %1 = arith.extui %0 : i1 to i32
    %c0_i32_0 = arith.constant 0 : i32
    %2 = arith.cmpi ne, %1, %c0_i32_0 : i32
    scf.if %2 {
      %cst_40 = arith.constant -1.000000e+30 : f32
      %69 = vector.broadcast %cst_40 : f32 to vector<8x1xf32>
      %c0_41 = arith.constant 0 : index
      %c0_42 = arith.constant 0 : index
      %70 = vector.load %arg9[%c0_41, %c0_42] : memref<8x1xf32, #tpu.memory_space<vmem>>, vector<8x1xf32>
      tpu.vector_store %arg9[%c0_41, %c0_42], %69 {strides = array<i32>} : memref<8x1xf32, #tpu.memory_space<vmem>>, vector<8x1xf32>,
      %cst_43 = arith.constant 0.000000e+00 : f32
      %71 = vector.broadcast %cst_43 : f32 to vector<8x1xf32>
      %c0_44 = arith.constant 0 : index
      %c0_45 = arith.constant 0 : index
      %72 = vector.load %arg10[%c0_44, %c0_45] : memref<8x1xf32, #tpu.memory_space<vmem>>, vector<8x1xf32>
      tpu.vector_store %arg10[%c0_44, %c0_45], %71 {strides = array<i32>} : memref<8x1xf32, #tpu.memory_space<vmem>>, vector<8x1xf32>,
      %cst_46 = arith.constant 0.000000e+00 : f32
      %73 = vector.broadcast %cst_46 : f32 to vector<8x1xf32>
      %c0_47 = arith.constant 0 : index
      %c0_48 = arith.constant 0 : index
      %74 = vector.load %arg11[%c0_47, %c0_48] : memref<8x1xf32, #tpu.memory_space<vmem>>, vector<8x1xf32>
      tpu.vector_store %arg11[%c0_47, %c0_48], %73 {strides = array<i32>} : memref<8x1xf32, #tpu.memory_space<vmem>>, vector<8x1xf32>,
    } else {
    }
    %c0 = arith.constant 0 : index
    %c0_1 = arith.constant 0 : index
    %3 = vector.load %arg2[%c0, %c0_1] : memref<8x128xf32, #tpu.memory_space<vmem>>, vector<8x128xf32>
    %c0_2 = arith.constant 0 : index
    %c0_3 = arith.constant 0 : index
    %4 = vector.load %arg4[%c0_2, %c0_3] : memref<8x128xf32, #tpu.memory_space<vmem>>, vector<8x128xf32>
    %cst = arith.constant dense<0.000000e+00> : vector<8x8xf32>
    %5 = tpu.matmul %3, %4, %cst {dimension_numbers = #tpu.dot_dimension_numbers<[1], [1], [0], [0], [0, 0, 1, 0], [], []>} : vector<8x128xf32>, vector<8x128xf32>, vector<8x8xf32> -> vector<8x8xf32>
    %c0_4 = arith.constant 0 : index
    %c0_5 = arith.constant 0 : index
    %6 = vector.load %arg2[%c0_4, %c0_5] : memref<8x128xf32, #tpu.memory_space<vmem>>, vector<8x128xf32>
    %c0_6 = arith.constant 0 : index
    %c0_7 = arith.constant 0 : index
    %7 = vector.load %arg5[%c0_6, %c0_7] : memref<8x128xf32, #tpu.memory_space<vmem>>, vector<8x128xf32>
    %cst_8 = arith.constant dense<0.000000e+00> : vector<8x8xf32>
    %8 = tpu.matmul %6, %7, %cst_8 {dimension_numbers = #tpu.dot_dimension_numbers<[1], [1], [0], [0], [0, 0, 1, 0], [], []>} : vector<8x128xf32>, vector<8x128xf32>, vector<8x8xf32> -> vector<8x8xf32>
    %c0_9 = arith.constant 0 : index
    %c0_10 = arith.constant 0 : index
    %9 = vector.load %arg3[%c0_9, %c0_10] : memref<8x1xf32, #tpu.memory_space<vmem>>, vector<8x1xf32>
    %10 = vector.broadcast %9 : vector<8x1xf32> to vector<8x8xf32>
    %11 = arith.mulf %5, %10 : vector<8x8xf32>
    %c0_11 = arith.constant 0 : index
    %c0_12 = arith.constant 0 : index
    %12 = vector.load %arg6[%c0_11, %c0_12] : memref<1x8xf32, #tpu.memory_space<vmem>>, vector<1x8xf32>
    %13 = vector.broadcast %12 : vector<1x8xf32> to vector<8x8xf32>
    %14 = arith.mulf %11, %13 : vector<8x8xf32>
    %15 = vector.broadcast %9 : vector<8x1xf32> to vector<8x8xf32>
    %16 = arith.mulf %8, %15 : vector<8x8xf32>
    %c0_13 = arith.constant 0 : index
    %c0_14 = arith.constant 0 : index
    %17 = vector.load %arg7[%c0_13, %c0_14] : memref<1x8xf32, #tpu.memory_space<vmem>>, vector<1x8xf32>
    %18 = vector.broadcast %17 : vector<1x8xf32> to vector<8x8xf32>
    %19 = arith.mulf %16, %18 : vector<8x8xf32>
    %c8_i32 = arith.constant 8 : i32
    %20 = arith.muli %arg0, %c8_i32 : i32
    %21 = tpu.iota {dimensions = array<i32: 0>} : vector<8x8xi32>
    %22 = vector.broadcast %20 : i32 to vector<8x8xi32>
    %23 = arith.addi %22, %21 : vector<8x8xi32>
    %c8_i32_15 = arith.constant 8 : i32
    %24 = arith.muli %arg1, %c8_i32_15 : i32
    %25 = tpu.iota {dimensions = array<i32: 1>} : vector<8x8xi32>
    %26 = vector.broadcast %24 : i32 to vector<8x8xi32>
    %27 = arith.addi %26, %25 : vector<8x8xi32>
    %28 = arith.cmpi eq, %23, %27 : vector<8x8xi32>
    %cst_16 = arith.constant 5.000000e-01 : f32
    %cst_17 = arith.constant 0.000000e+00 : f32
    %29 = vector.broadcast %cst_16 : f32 to vector<8x8xf32>
    %30 = vector.broadcast %cst_17 : f32 to vector<8x8xf32>
    %31 = arith.select %28, %29, %30 : vector<8x8xi1>, vector<8x8xf32>
    %32 = arith.addf %19, %31 : vector<8x8xf32>
    %cst_18 = arith.constant dense<0xFF800000> : vector<8xf32>
    %33 = vector.multi_reduction <maximumf>, %14, %cst_18 [1] : vector<8x8xf32> to vector<8xf32>
    %34 = vector.shape_cast %33 : vector<8xf32> to vector<8x1xf32>
    %cst_19 = arith.constant dense<0xFF800000> : vector<8xf32>
    %35 = vector.multi_reduction <maximumf>, %32, %cst_19 [1] : vector<8x8xf32> to vector<8xf32>
    %36 = vector.shape_cast %35 : vector<8xf32> to vector<8x1xf32>
    %37 = arith.maximumf %34, %36 : vector<8x1xf32>
    %c0_20 = arith.constant 0 : index
    %c0_21 = arith.constant 0 : index
    %38 = vector.load %arg9[%c0_20, %c0_21] : memref<8x1xf32, #tpu.memory_space<vmem>>, vector<8x1xf32>
    %39 = arith.maximumf %38, %37 : vector<8x1xf32>
    %c0_22 = arith.constant 0 : index
    %c0_23 = arith.constant 0 : index
    %40 = vector.load %arg9[%c0_22, %c0_23] : memref<8x1xf32, #tpu.memory_space<vmem>>, vector<8x1xf32>
    %41 = arith.subf %40, %39 : vector<8x1xf32>
    %42 = math.exp %41 : vector<8x1xf32>
    %c0_24 = arith.constant 0 : index
    %c0_25 = arith.constant 0 : index
    %43 = vector.load %arg10[%c0_24, %c0_25] : memref<8x1xf32, #tpu.memory_space<vmem>>, vector<8x1xf32>
    %44 = arith.mulf %42, %43 : vector<8x1xf32>
    %45 = vector.broadcast %39 : vector<8x1xf32> to vector<8x8xf32>
    %46 = arith.subf %14, %45 : vector<8x8xf32>
    %47 = math.exp %46 : vector<8x8xf32>
    %cst_26 = arith.constant dense<0.000000e+00> : vector<8xf32>
    %48 = vector.multi_reduction <add>, %47, %cst_26 [1] : vector<8x8xf32> to vector<8xf32>
    %49 = vector.shape_cast %48 : vector<8xf32> to vector<8x1xf32>
    %50 = arith.addf %44, %49 : vector<8x1xf32>
    %51 = vector.broadcast %39 : vector<8x1xf32> to vector<8x8xf32>
    %52 = arith.subf %32, %51 : vector<8x8xf32>
    %53 = math.exp %52 : vector<8x8xf32>
    %cst_27 = arith.constant dense<0.000000e+00> : vector<8xf32>
    %54 = vector.multi_reduction <add>, %53, %cst_27 [1] : vector<8x8xf32> to vector<8xf32>
    %55 = vector.shape_cast %54 : vector<8xf32> to vector<8x1xf32>
    %56 = arith.addf %50, %55 : vector<8x1xf32>
    %c0_28 = arith.constant 0 : index
    %c0_29 = arith.constant 0 : index
    %57 = vector.load %arg10[%c0_28, %c0_29] : memref<8x1xf32, #tpu.memory_space<vmem>>, vector<8x1xf32>
    tpu.vector_store %arg10[%c0_28, %c0_29], %56 {strides = array<i32>} : memref<8x1xf32, #tpu.memory_space<vmem>>, vector<8x1xf32>,
    %c0_30 = arith.constant 0 : index
    %c0_31 = arith.constant 0 : index
    %58 = vector.load %arg11[%c0_30, %c0_31] : memref<8x1xf32, #tpu.memory_space<vmem>>, vector<8x1xf32>
    %cst_32 = arith.constant 0.000000e+00 : f32
    %59 = vector.broadcast %cst_32 : f32 to vector<8x8xf32>
    %60 = arith.select %28, %14, %59 : vector<8x8xi1>, vector<8x8xf32>
    %cst_33 = arith.constant dense<0.000000e+00> : vector<8xf32>
    %61 = vector.multi_reduction <add>, %60, %cst_33 [1] : vector<8x8xf32> to vector<8xf32>
    %62 = vector.shape_cast %61 : vector<8xf32> to vector<8x1xf32>
    %63 = arith.addf %58, %62 : vector<8x1xf32>
    %c0_34 = arith.constant 0 : index
    %c0_35 = arith.constant 0 : index
    %64 = vector.load %arg11[%c0_34, %c0_35] : memref<8x1xf32, #tpu.memory_space<vmem>>, vector<8x1xf32>
    tpu.vector_store %arg11[%c0_34, %c0_35], %63 {strides = array<i32>} : memref<8x1xf32, #tpu.memory_space<vmem>>, vector<8x1xf32>,
    %c0_36 = arith.constant 0 : index
    %c0_37 = arith.constant 0 : index
    %65 = vector.load %arg9[%c0_36, %c0_37] : memref<8x1xf32, #tpu.memory_space<vmem>>, vector<8x1xf32>
    tpu.vector_store %arg9[%c0_36, %c0_37], %39 {strides = array<i32>} : memref<8x1xf32, #tpu.memory_space<vmem>>, vector<8x1xf32>,
    %c0_i32_38 = arith.constant 0 : i32
    %66 = arith.cmpi eq, %arg1, %c0_i32_38 : i32
    %67 = arith.extui %66 : i1 to i32
    %c0_i32_39 = arith.constant 0 : i32
    %68 = arith.cmpi ne, %67, %c0_i32_39 : i32
    scf.if %68 {
      %c0_40 = arith.constant 0 : index
      %c0_41 = arith.constant 0 : index
      %69 = vector.load %arg9[%c0_40, %c0_41] : memref<8x1xf32, #tpu.memory_space<vmem>>, vector<8x1xf32>
      %c0_42 = arith.constant 0 : index
      %c0_43 = arith.constant 0 : index
      %70 = vector.load %arg10[%c0_42, %c0_43] : memref<8x1xf32, #tpu.memory_space<vmem>>, vector<8x1xf32>
      %71 = math.log %70 : vector<8x1xf32>
      %72 = arith.addf %69, %71 : vector<8x1xf32>
      %c0_44 = arith.constant 0 : index
      %c0_45 = arith.constant 0 : index
      %73 = vector.load %arg11[%c0_44, %c0_45] : memref<8x1xf32, #tpu.memory_space<vmem>>, vector<8x1xf32>
      %74 = arith.subf %72, %73 : vector<8x1xf32>
      %c0_46 = arith.constant 0 : index
      %c0_47 = arith.constant 0 : index
      %75 = vector.load %arg8[%c0_46, %c0_47] : memref<8x1xf32, #tpu.memory_space<vmem>>, vector<8x1xf32>
      tpu.vector_store %arg8[%c0_46, %c0_47], %74 {strides = array<i32>} : memref<8x1xf32, #tpu.memory_space<vmem>>, vector<8x1xf32>,
    } else {
    }
    return
  }
  func.func @transform_0(%arg0: i32, %arg1: i32) -> (i32, i32) {
    %c0_i32 = arith.constant 0 : i32
    %c0_i32_0 = arith.constant 0 : i32
    return %arg0, %c0_i32 : i32, i32
  }
  func.func @transform_1(%arg0: i32, %arg1: i32) -> (i32, i32) {
    %c0_i32 = arith.constant 0 : i32
    %c0_i32_0 = arith.constant 0 : i32
    return %arg0, %c0_i32 : i32, i32
  }
  func.func @transform_2(%arg0: i32, %arg1: i32) -> (i32, i32) {
    %c0_i32 = arith.constant 0 : i32
    %c0_i32_0 = arith.constant 0 : i32
    return %arg1, %c0_i32 : i32, i32
  }
  func.func @transform_3(%arg0: i32, %arg1: i32) -> (i32, i32) {
    %c0_i32 = arith.constant 0 : i32
    %c0_i32_0 = arith.constant 0 : i32
    return %arg1, %c0_i32 : i32, i32
  }
  func.func @transform_4(%arg0: i32, %arg1: i32) -> (i32, i32) {
    %c0_i32 = arith.constant 0 : i32
    %c0_i32_0 = arith.constant 0 : i32
    return %c0_i32, %arg1 : i32, i32
  }
  func.func @transform_5(%arg0: i32, %arg1: i32) -> (i32, i32) {
    %c0_i32 = arith.constant 0 : i32
    %c0_i32_0 = arith.constant 0 : i32
    return %c0_i32, %arg1 : i32, i32
  }
  func.func @transform_6(%arg0: i32, %arg1: i32) -> (i32, i32) {
    %c0_i32 = arith.constant 0 : i32
    %c0_i32_0 = arith.constant 0 : i32
    return %arg0, %c0_i32 : i32, i32
  }
}

</mosaic_0001>

<llo_original>
// kernel: tpu_custom_call.1
$region0: #{tpu_custom_call.1}
  #allocation0 [shape = 'u32[]', space=smem, size = 0x4, offset = 0x4, fixed_abs, tag = 'smem constant byte address 0x4 - core index']
  #allocation1 [shape = 'u32[144,128]{1,0:T(1,128)}', space=vmem, size = 0x12000, scoped, tag = 'internal scratch']
  #allocation2 [shape = 'f32[8,1]{1,0:T(8,128)}', space=vmem, size = 0x1000, scoped, tag = 'scratch operand']
  #allocation3 [shape = 'f32[8,1]{1,0:T(8,128)}', space=vmem, size = 0x1000, scoped, tag = 'scratch operand']
  #allocation4 [shape = 'f32[8,1]{1,0:T(8,128)}', space=vmem, size = 0x1000, scoped, tag = 'scratch operand']
  %s0 = inlined_call_operand.vmem [shape: f32[8,128], index: 0, kind: input, shape index: {}]
  %s1 = inlined_call_operand.vmem [shape: f32[8,1], index: 1, kind: input, shape index: {}]
  %s2 = inlined_call_operand.vmem [shape: f32[8,128], index: 2, kind: input, shape index: {}]
  %s3 = inlined_call_operand.hbm [shape: f32[8,128], index: 3, kind: input, shape index: {}]
  %s4 = inlined_call_operand.vmem [shape: f32[1,8], index: 4, kind: input, shape index: {}]
  %s5 = inlined_call_operand.vmem [shape: f32[1,8], index: 5, kind: input, shape index: {}]
  %s6 = inlined_call_operand.vmem [shape: f32[8,1], index: 6, kind: output, shape index: {}]
  %s7 = sld [smem:[#allocation0]]
  $region46: #{tpu_custom_call.1} parent=0
    _
  %s9 = ssub.s32 1, %s7
  %s10 = scalar_select 0, %s9, %s7
  $region1: #{tpu_custom_call.1} parent=0
    #allocation5 [shape = 'u8[4096]{0}', space=vmem, size = 0x1000, scoped, tag = 'input window, operand 3, single buffered']
    #allocation6 [shape = 's32[1]{0}', space=sflag, size = 0x4, scoped, tag = 'scoped memory for tpu_custom_call.1']
    %11 = vsyncpa [#allocation6], 0
    // Predicated region
    $region2: #{tpu_custom_call.1} parent=1 // pred_check
      _
    $region3: #{tpu_custom_call.1} parent=1 // pred_check_branch
      %13 = sbr.rel (0) target = $region5
    $region4: #{tpu_custom_call.1} parent=1 // pred_region
      _
    $region5: #{tpu_custom_call.1} parent=1 // pred_fallthru
      _
    // Predicated region
    $region6: #{tpu_custom_call.1} parent=1 // pred_check
      _
    $region7: #{tpu_custom_call.1} parent=1 // pred_check_branch
      %15 = sbr.rel (0) target = $region9
    $region8: #{tpu_custom_call.1} parent=1 // pred_region
      _
    $region9: #{tpu_custom_call.1} parent=1 // pred_fallthru
      _
    // Predicated region
    $region10: #{tpu_custom_call.1} parent=1 // pred_check
      _
    $region11: #{tpu_custom_call.1} parent=1 // pred_check_branch
      %17 = sbr.rel (0) target = $region13
    $region12: #{tpu_custom_call.1} parent=1 // pred_region
      _
    $region13: #{tpu_custom_call.1} parent=1 // pred_fallthru
      _
    // Predicated region
    $region14: #{tpu_custom_call.1} parent=1 // pred_check
      _
    $region15: #{tpu_custom_call.1} parent=1 // pred_check_branch
      %19 = sbr.rel (0) target = $region17
    $region16: #{tpu_custom_call.1} parent=1 // pred_region
      %s21 = ssub.s32 128, 128
      %22 = vsyncadd [#allocation6], %s21
      %s24 = sshll.u32 [#allocation5], 4
      %s25 = int_to_ptr.vmem [resolvable:$true] %s24
      %27 = dma.hbm_to_vmem [thread:$0]  %s3, 128, %s25, [#allocation6]
    $region17: #{tpu_custom_call.1} parent=1 // pred_fallthru
      _
    // Predicated region
    $region18: #{tpu_custom_call.1} parent=1 // pred_check
      _
    $region19: #{tpu_custom_call.1} parent=1 // pred_check_branch
      %29 = sbr.rel (0) target = $region21
    $region20: #{tpu_custom_call.1} parent=1 // pred_region
      _
    $region21: #{tpu_custom_call.1} parent=1 // pred_fallthru
      _
    // Predicated region
    $region22: #{tpu_custom_call.1} parent=1 // pred_check
      _
    $region23: #{tpu_custom_call.1} parent=1 // pred_check_branch
      %31 = sbr.rel (0) target = $region25
    $region24: #{tpu_custom_call.1} parent=1 // pred_region
      _
    $region25: #{tpu_custom_call.1} parent=1 // pred_fallthru
      _
    // Predicated region
    $region26: #{tpu_custom_call.1} parent=1 // pred_check
      _
    $region27: #{tpu_custom_call.1} parent=1 // pred_check_branch
      %33 = sbr.rel (0) target = $region29
    $region28: #{tpu_custom_call.1} parent=1 // pred_region
      %34 = dma.done [#allocation6], 128
    $region29: #{tpu_custom_call.1} parent=1 // pred_fallthru
      _
    %p35 = scmp.eq.s32.totalorder 0, 0
    // Predicated region
    $region30: #{tpu_custom_call.1} parent=1 // pred_check
      %p36 = pneg %p35
    $region31: #{tpu_custom_call.1} parent=1 // pred_check_branch
      %38 = sbr.rel (%p36) target = $region33
    $region32: #{tpu_custom_call.1} parent=1 // pred_region
      %vm39 = vcmask 7168
      %40 = vst.msk [vmem:[#allocation2] sm:$0xff] %vm39, -1e+30
      %41 = vst.msk [vmem:[#allocation3] sm:$0xff] %vm39, 0.0
      %42 = vst.msk [vmem:[#allocation4] sm:$0xff] %vm39, 0.0
    $region33: #{tpu_custom_call.1} parent=1 // pred_fallthru
      _
    %v43 = vld [vmem:[%s0] sm:$0xff]
    %v44 = vld [vmem:[%s2] sm:$0xff]
    %45 = vmatprep.subr.mxu0 0.0
    %46 = vmatpush1.xpose.msra.mxu0 %v44
    %47 = vmatprep.subr.mxu0 0.0
    %48 = vmatpush1.xpose.msra.mxu0 0.0
    %49 = vmatprep.subr.mxu0 0.0
    %50 = vmatpush1.xpose.msra.mxu0 0.0
    %51 = vmatprep.subr.mxu0 0.0
    %52 = vmatpush1.xpose.msra.mxu0 0.0
    %53 = vmatprep.subr.mxu0 0.0
    %54 = vmatpush1.xpose.msra.mxu0 0.0
    %55 = vmatprep.subr.mxu0 0.0
    %56 = vmatpush1.xpose.msra.mxu0 0.0
    %57 = vmatprep.subr.mxu0 0.0
    %58 = vmatpush1.xpose.msra.mxu0 0.0
    %59 = vmatprep.subr.mxu0 0.0
    %60 = vmatpush1.xpose.msra.mxu0 0.0
    %61 = vmatprep.subr.mxu0 0.0
    %62 = vmatpush1.xpose.msra.mxu0 0.0
    %63 = vmatprep.subr.mxu0 0.0
    %64 = vmatpush1.xpose.msra.mxu0 0.0
    %65 = vmatprep.subr.mxu0 0.0
    %66 = vmatpush1.xpose.msra.mxu0 0.0
    %67 = vmatprep.subr.mxu0 0.0
    %68 = vmatpush1.xpose.msra.mxu0 0.0
    %69 = vmatprep.subr.mxu0 0.0
    %70 = vmatpush1.xpose.msra.mxu0 0.0
    %71 = vmatprep.subr.mxu0 0.0
    %72 = vmatpush1.xpose.msra.mxu0 0.0
    %73 = vmatprep.subr.mxu0 0.0
    %74 = vmatpush1.xpose.msra.mxu0 0.0
    %75 = vmatprep.subr.mxu0 0.0
    %76 = vmatpush1.xpose.msra.mxu0 0.0
    %77 = vmatprep.subr.mxu0 0.0
    %78 = vmatpush1.xpose.msra.mxu0 0.0
    %79 = vmatprep.subr.mxu0 0.0
    %80 = vmatpush1.xpose.msra.mxu0 0.0
    %81 = vmatprep.subr.mxu0 0.0
    %82 = vmatpush1.xpose.msra.mxu0 0.0
    %83 = vmatprep.subr.mxu0 0.0
    %84 = vmatpush1.xpose.msra.mxu0 0.0
    %85 = vmatprep.subr.mxu0 0.0
    %86 = vmatpush1.xpose.msra.mxu0 0.0
    %87 = vmatprep.subr.mxu0 0.0
    %88 = vmatpush1.xpose.msra.mxu0 0.0
    %89 = vmatprep.subr.mxu0 0.0
    %90 = vmatpush1.xpose.msra.mxu0 0.0
    %91 = vmatprep.subr.mxu0 0.0
    %92 = vmatpush1.xpose.msra.mxu0 0.0
    %93 = vmatprep.subr.mxu0 0.0
    %94 = vmatpush1.xpose.msra.mxu0 0.0
    %95 = vmatprep.subr.mxu0 0.0
    %96 = vmatpush1.xpose.msra.mxu0 0.0
    %97 = vmatprep.subr.mxu0 0.0
    %98 = vmatpush1.xpose.msra.mxu0 0.0
    %99 = vmatprep.subr.mxu0 0.0
    %100 = vmatpush1.xpose.msra.mxu0 0.0
    %101 = vmatprep.subr.mxu0 0.0
    %102 = vmatpush1.xpose.msra.mxu0 0.0
    %103 = vmatprep.subr.mxu0 0.0
    %104 = vmatpush1.xpose.msra.mxu0 0.0
    %105 = vmatprep.subr.mxu0 0.0
    %106 = vmatpush1.xpose.msra.mxu0 0.0
    %107 = vmatprep.subr.mxu0 0.0
    %108 = vmatpush1.xpose.msra.mxu0 0.0
    %109 = vmatprep.mubr.f32.mxu0 0.0
    %110 = vmatmul.mubr.f32.gmra.mrb[0].mxu0 %v43
    %v111 = vpop.f32.mrb[0].mxu0
    %v112 = vadd.f32 0.0, %v111
    %v113 = vpop.f32.mrb[0].mxu0
    %114 = vdwg.mxu0
    %v115 = vld [vmem:[#allocation5] sm:$0xff]
    %116 = vmatprep.subr.mxu0 0.0
    %117 = vmatpush1.xpose.msra.mxu0 %v115
    %118 = vmatprep.subr.mxu0 0.0
    %119 = vmatpush1.xpose.msra.mxu0 0.0
    %120 = vmatprep.subr.mxu0 0.0
    %121 = vmatpush1.xpose.msra.mxu0 0.0
    %122 = vmatprep.subr.mxu0 0.0
    %123 = vmatpush1.xpose.msra.mxu0 0.0
    %124 = vmatprep.subr.mxu0 0.0
    %125 = vmatpush1.xpose.msra.mxu0 0.0
    %126 = vmatprep.subr.mxu0 0.0
    %127 = vmatpush1.xpose.msra.mxu0 0.0
    %128 = vmatprep.subr.mxu0 0.0
    %129 = vmatpush1.xpose.msra.mxu0 0.0
    %130 = vmatprep.subr.mxu0 0.0
    %131 = vmatpush1.xpose.msra.mxu0 0.0
    %132 = vmatprep.subr.mxu0 0.0
    %133 = vmatpush1.xpose.msra.mxu0 0.0
    %134 = vmatprep.subr.mxu0 0.0
    %135 = vmatpush1.xpose.msra.mxu0 0.0
    %136 = vmatprep.subr.mxu0 0.0
    %137 = vmatpush1.xpose.msra.mxu0 0.0
    %138 = vmatprep.subr.mxu0 0.0
    %139 = vmatpush1.xpose.msra.mxu0 0.0
    %140 = vmatprep.subr.mxu0 0.0
    %141 = vmatpush1.xpose.msra.mxu0 0.0
    %142 = vmatprep.subr.mxu0 0.0
    %143 = vmatpush1.xpose.msra.mxu0 0.0
    %144 = vmatprep.subr.mxu0 0.0
    %145 = vmatpush1.xpose.msra.mxu0 0.0
    %146 = vmatprep.subr.mxu0 0.0
    %147 = vmatpush1.xpose.msra.mxu0 0.0
    %148 = vmatprep.subr.mxu0 0.0
    %149 = vmatpush1.xpose.msra.mxu0 0.0
    %150 = vmatprep.subr.mxu0 0.0
    %151 = vmatpush1.xpose.msra.mxu0 0.0
    %152 = vmatprep.subr.mxu0 0.0
    %153 = vmatpush1.xpose.msra.mxu0 0.0
    %154 = vmatprep.subr.mxu0 0.0
    %155 = vmatpush1.xpose.msra.mxu0 0.0
    %156 = vmatprep.subr.mxu0 0.0
    %157 = vmatpush1.xpose.msra.mxu0 0.0
    %158 = vmatprep.subr.mxu0 0.0
    %159 = vmatpush1.xpose.msra.mxu0 0.0
    %160 = vmatprep.subr.mxu0 0.0
    %161 = vmatpush1.xpose.msra.mxu0 0.0
    %162 = vmatprep.subr.mxu0 0.0
    %163 = vmatpush1.xpose.msra.mxu0 0.0
    %164 = vmatprep.subr.mxu0 0.0
    %165 = vmatpush1.xpose.msra.mxu0 0.0
    %166 = vmatprep.subr.mxu0 0.0
    %167 = vmatpush1.xpose.msra.mxu0 0.0
    %168 = vmatprep.subr.mxu0 0.0
    %169 = vmatpush1.xpose.msra.mxu0 0.0
    %170 = vmatprep.subr.mxu0 0.0
    %171 = vmatpush1.xpose.msra.mxu0 0.0
    %172 = vmatprep.subr.mxu0 0.0
    %173 = vmatpush1.xpose.msra.mxu0 0.0
    %174 = vmatprep.subr.mxu0 0.0
    %175 = vmatpush1.xpose.msra.mxu0 0.0
    %176 = vmatprep.subr.mxu0 0.0
    %177 = vmatpush1.xpose.msra.mxu0 0.0
    %178 = vmatprep.subr.mxu0 0.0
    %179 = vmatpush1.xpose.msra.mxu0 0.0
    %180 = vmatprep.mubr.f32.mxu0 0.0
    %181 = vmatmul.mubr.f32.gmra.mrb[0].mxu0 %v43
    %v182 = vpop.f32.mrb[0].mxu0
    %v183 = vadd.f32 0.0, %v182
    %v184 = vpop.f32.mrb[0].mxu0
    %185 = vdwg.mxu0
    %v186 = vld [vmem:[%s1] sm:$0xff]
    %188 = vset.pattern.permute.xlu0 0
    %189 = vperm.xlu0 %188, %v186
    %v190 = vpop.permute.xlu0 %189
    %v192 = vmul.f32 %v112, %v190
    %v193 = vld [vmem:[%s4] sm:$0x1]
    %v195 = vlaneseq
    %v196 = vshrl.u32 %v195, 7
    %v197 = vsub.s32 0, %v196
    %v198 = vrot.slane %v193, %v197
    %v200 = vmul.f32 %v192, %v198
    %v201 = vmul.f32 %v183, %v190
    %v202 = vld [vmem:[%s5] sm:$0x1]
    %v204 = vlaneseq
    %v205 = vshrl.u32 %v204, 7
    %v206 = vsub.s32 0, %v205
    %v207 = vrot.slane %v202, %v206
    %v209 = vmul.f32 %v201, %v207
    %s210 = smul.u32 0, 8
    %v211 = vlaneseq
    %v212 = vshrl.u32 %v211, 7
    %v213 = vstv %s210
    %v214 = vadd.s32 %v213, %v212
    %s215 = smul.u32 0, 8
    %v216 = vlaneseq
    %v217 = vand.u32 %v216, 127
    %v218 = vstv %s215
    %v219 = vadd.s32 %v218, %v217
    %vm220 = vcmp.eq.s32.totalorder %v214, %v219
    %v221 = vsel %vm220, 0.5, 0.0
    %v222 = vadd.f32 %v209, %v221
    %vm223 = vcmask 64512
    %v224 = vsel %vm223, %v200, -inf
    %225 = vmax.xlane.f32.xlu0 %v224
    %v226 = vpop.xlane.xlu0 %225
    %v227 = vsel %vm223, %v222, -inf
    %228 = vmax.xlane.f32.xlu0 %v227
    %v229 = vpop.xlane.xlu0 %228
    %v230 = vmax.f32 %v226, %v229
    %v231 = vld [vmem:[#allocation2] sm:$0xff]
    %v232 = vmax.f32 %v231, %v230
    %v233 = vsub.f32 %v231, %v232
    %v234 = vmul.f32 %v233, 1.442695
    %v235 = vpow.pop %v234
    %v236 = vld [vmem:[#allocation3] sm:$0xff]
    %v237 = vmul.f32 %v235, %v236
    %239 = vset.pattern.permute.xlu0 0
    %240 = vperm.xlu0 %239, %v232
    %v241 = vpop.permute.xlu0 %240
    %v243 = vsub.f32 %v200, %v241
    %v244 = vmul.f32 %v243, 1.442695
    %v245 = vpow.pop %v244
    %v246 = vsel %vm223, %v245, 0.0
    %247 = vadd.xlane.f32.xlu0 %v246
    %v248 = vpop.xlane.xlu0 %247
    %v249 = vadd.f32 %v237, %v248
    %v250 = vsub.f32 %v222, %v241
    %v251 = vmul.f32 %v250, 1.442695
    %v252 = vpow.pop %v251
    %v253 = vsel %vm223, %v252, 0.0
    %254 = vadd.xlane.f32.xlu0 %v253
    %v255 = vpop.xlane.xlu0 %254
    %v256 = vadd.f32 %v249, %v255
    %vm257 = vcmask 7168
    %258 = vst.msk [vmem:[#allocation3] sm:$0xff] %vm257, %v256
    %v259 = vld [vmem:[#allocation4] sm:$0xff]
    %v260 = vsel %vm220, %v200, 0.0
    %v261 = vsel %vm223, %v260, 0.0
    %262 = vadd.xlane.f32.xlu0 %v261
    %v263 = vpop.xlane.xlu0 %262
    %v264 = vadd.f32 %v259, %v263
    %265 = vst.msk [vmem:[#allocation4] sm:$0xff] %vm257, %v264
    %266 = vst.msk [vmem:[#allocation2] sm:$0xff] %vm257, %v232
    // Predicated region
    $region34: #{tpu_custom_call.1} parent=1 // pred_check
      %p267 = pneg %p35
    $region35: #{tpu_custom_call.1} parent=1 // pred_check_branch
      %269 = sbr.rel (%p267) target = $region37
    $region36: #{tpu_custom_call.1} parent=1 // pred_region
      %v270 = vld [vmem:[#allocation2] sm:$0xff]
      %v271 = vld [vmem:[#allocation3] sm:$0xff]
      %v272 = vlog2.pop %v271
      %v273 = vmul.f32 %v272, 0.6931472
      %v274 = vadd.f32 %v270, %v273
      %v275 = vld [vmem:[#allocation4] sm:$0xff]
      %v276 = vsub.f32 %v274, %v275
      %277 = vst.msk [vmem:[%s6] sm:$0xff] %vm257, %v276
    $region37: #{tpu_custom_call.1} parent=1 // pred_fallthru
      _
    // Predicated region
    $region38: #{tpu_custom_call.1} parent=1 // pred_check
      _
    $region39: #{tpu_custom_call.1} parent=1 // pred_check_branch
      %279 = sbr.rel (0) target = $region41
    $region40: #{tpu_custom_call.1} parent=1 // pred_region
      _
    $region41: #{tpu_custom_call.1} parent=1 // pred_fallthru
      _
    // Predicated region
    $region42: #{tpu_custom_call.1} parent=1 // pred_check
      _
    $region43: #{tpu_custom_call.1} parent=1 // pred_check_branch
      %281 = sbr.rel (0) target = $region45
    $region44: #{tpu_custom_call.1} parent=1 // pred_region
      _
    $region45: #{tpu_custom_call.1} parent=1 // pred_fallthru
      _
    %282 = vsyncpa [#allocation6], 1

</llo_original>
